<compile_context>
chip_gen: v6e
topology: v6e:2x2x1
jax: 0.10.0
libtpu: 0.0.40
codegen_flags: <defaults>
</compile_context>

<pallas_src>
import jax
import jax.numpy as jnp
from jax.experimental import pallas as pl
from jax.experimental.pallas import tpu as pltpu


def _copy_kernel(x_ref, o_ref):
    # Elementwise pass-through on one VMEM tile.
    o_ref[...] = x_ref[...]


_LANE_CANDIDATES = (8192, 4096, 2048, 1024, 512, 256, 128)
# ~4 MiB per block; with double buffering on input + output the VMEM working
# set is ~16 MiB, which fits every generation's scoped-VMEM budget.
_TARGET_BLOCK_BYTES = 4 * 1024 * 1024


def _sublane_multiple(dtype) -> int:
    # f32 -> 8, bf16 -> 16, int8/fp8 -> 32 (sub-32-bit dtypes pack sublanes).
    itemsize = jnp.dtype(dtype).itemsize
    return max(8, 32 // max(itemsize, 1))


def _materialized_copy(x):
    """Bit-exact device copy of x via a lane-dense, row-tiled Pallas kernel."""
    total = x.size
    lane = next((l for l in _LANE_CANDIDATES if total % l == 0), None)

    if lane is None:
        # Fallback for element counts not divisible by 128: single full-array
        # block copy on a 2-D view (correct, just not roofline-optimal).
        x2d = x.reshape(-1, x.shape[-1])
        out2d = pl.pallas_call(
            _copy_kernel,
            out_shape=jax.ShapeDtypeStruct(x2d.shape, x2d.dtype),
            grid=(1,),
            in_specs=[pl.BlockSpec(x2d.shape, lambda i: (0, 0))],
            out_specs=pl.BlockSpec(x2d.shape, lambda i: (0, 0)),
        )(x2d)
        return out2d.reshape(x.shape)

    rows = total // lane
    itemsize = jnp.dtype(x.dtype).itemsize
    sub = _sublane_multiple(x.dtype)

    tile_r = max(1, _TARGET_BLOCK_BYTES // (lane * itemsize))
    tile_r = min(tile_r, rows)
    if tile_r < rows and tile_r >= sub:
        # Keep the sublane dim a multiple of the dtype packing when the block
        # does not span the full row extent (the (8,128) rule).
        tile_r = (tile_r // sub) * sub

    x2d = x.reshape(rows, lane)
    grid = (pl.cdiv(rows, tile_r),)

    out2d = pl.pallas_call(
        _copy_kernel,
        out_shape=jax.ShapeDtypeStruct(x2d.shape, x2d.dtype),
        grid=grid,
        in_specs=[pl.BlockSpec((tile_r, lane), lambda i: (i, 0))],
        out_specs=pl.BlockSpec((tile_r, lane), lambda i: (i, 0)),
        compiler_params=pltpu.CompilerParams(
            # "parallel": lets v7x shard the row tiles across both TensorCores.
            dimension_semantics=("parallel",),
            # Headroom above the default scoped limit (esp. v5e's 16 MiB).
            vmem_limit_bytes=64 * 1024 * 1024,
        ),
    )(x2d)
    return out2d.reshape(x.shape)


def identity_fn_forward(x, materialize: bool = False, **kwargs):
    """Pallas implementation of IdentityFn.forward: returns x.

    Default path is the zero-cost identity (no kernel, no HBM traffic) — the
    theoretical optimum for `return x`.  Set `materialize=True` to force a
    distinct output buffer produced by the tiled Pallas copy kernel.
    `kwargs` are accepted and ignored, matching the reference signature.
    """
    if not materialize:
        return x
    return _materialized_copy(x)


if __name__ == "__main__":
    key = jax.random.PRNGKey(0)
    # Small NCHW input consistent with the module's (image-model) usage.
    x = jax.random.normal(key, (2, 4, 16, 16), dtype=jnp.float32)

    # Default (optimal) path: no kernel, identity.
    y_fast = identity_fn_forward(x)
    y_fast = jax.block_until_ready(y_fast)
    assert y_fast.shape == x.shape and y_fast.dtype == x.dtype
    assert bool(jnp.all(y_fast == x))

    # Materialized path: exercises the Pallas copy kernel once.
    y_copy = identity_fn_forward(x, materialize=True)
    y_copy = jax.block_until_ready(y_copy)
    assert y_copy.shape == x.shape and y_copy.dtype == x.dtype
    assert bool(jnp.all(y_copy == x))

    print("KERNEL_OK")
</pallas_src>

<mosaic_0001>
module attributes {stable_mosaic.version = 11 : i64} {
  func.func @_copy_kernel(%arg0: i32, %arg1: memref<1x2048xf32, #tpu.memory_space<vmem>>, %arg2: memref<1x2048xf32, #tpu.memory_space<vmem>>) attributes {dimension_semantics = [#tpu.dimension_semantics<parallel>], iteration_bounds = array<i64: 1>, scalar_prefetch = 0 : i64, scratch_operands = 0 : i64, tpu.core_type = #tpu.core_type<tc>, window_params = [{transform_indices = @transform_0, window_bounds = array<i64: 1, 2048>}, {transform_indices = @transform_1, window_bounds = array<i64: 1, 2048>}]} {
    %c0 = arith.constant 0 : index
    %c0_0 = arith.constant 0 : index
    %0 = vector.load %arg1[%c0, %c0_0] : memref<1x2048xf32, #tpu.memory_space<vmem>>, vector<1x2048xf32>
    %c0_1 = arith.constant 0 : index
    %c0_2 = arith.constant 0 : index
    %1 = vector.load %arg2[%c0_1, %c0_2] : memref<1x2048xf32, #tpu.memory_space<vmem>>, vector<1x2048xf32>
    tpu.vector_store %arg2[%c0_1, %c0_2], %0 {strides = array<i32>} : memref<1x2048xf32, #tpu.memory_space<vmem>>, vector<1x2048xf32>,
    return
  }
  func.func @transform_0(%arg0: i32) -> (i32, i32) {
    %c0_i32 = arith.constant 0 : i32
    %c0_i32_0 = arith.constant 0 : i32
    return %arg0, %c0_i32 : i32, i32
  }
  func.func @transform_1(%arg0: i32) -> (i32, i32) {
    %c0_i32 = arith.constant 0 : i32
    %c0_i32_0 = arith.constant 0 : i32
    return %arg0, %c0_i32 : i32, i32
  }
}

</mosaic_0001>

<llo_original>
// kernel: tpu_custom_call.1
$region0: #{tpu_custom_call.1}
  #allocation0 [shape = 'u32[]', space=smem, size = 0x4, offset = 0x4, fixed_abs, tag = 'smem constant byte address 0x4 - core index']
  #allocation1 [shape = 'u32[144,128]{1,0:T(1,128)}', space=vmem, size = 0x12000, scoped, tag = 'internal scratch']
  %s0 = inlined_call_operand.hbm [shape: f32[1,2048], index: 0, kind: input, shape index: {}]
  %s1 = inlined_call_operand.hbm [shape: f32[1,2048], index: 1, kind: output, shape index: {}]
  %s2 = sld [smem:[#allocation0]]
  $region18: #{tpu_custom_call.1} parent=0
    _
  %s4 = ssub.s32 1, %s2
  %s5 = scalar_select 0, %s4, %s2
  $region1: #{tpu_custom_call.1} parent=0
    #allocation2 [shape = 'u8[8192]{0}', space=vmem, size = 0x2000, scoped, tag = 'input window, operand 0, single buffered']
    #allocation3 [shape = 's32[1]{0}', space=sflag, size = 0x4, scoped, tag = 'scoped memory for tpu_custom_call.1']
    #allocation4 [shape = 's32[1]{0}', space=sflag, size = 0x4, scoped, tag = 'scoped memory for tpu_custom_call.1']
    #allocation5 [shape = 'u8[8192]{0}', space=vmem, size = 0x2000, scoped, tag = 'output window, operand 0, single buffered']
    %6 = vsyncpa [#allocation3], 0
    %7 = vsyncpa [#allocation4], 0
    // Predicated region
    $region2: #{tpu_custom_call.1} parent=1 // pred_check
      _
    $region3: #{tpu_custom_call.1} parent=1 // pred_check_branch
      %9 = sbr.rel (0) target = $region5
    $region4: #{tpu_custom_call.1} parent=1 // pred_region
      %s11 = ssub.s32 256, 256
      %12 = vsyncadd [#allocation3], %s11
      %s14 = sshll.u32 [#allocation2], 4
      %s15 = int_to_ptr.vmem [resolvable:$true] %s14
      %17 = dma.hbm_to_vmem [thread:$0]  %s0, 256, %s15, [#allocation3]
    $region5: #{tpu_custom_call.1} parent=1 // pred_fallthru
      _
    // Predicated region
    $region6: #{tpu_custom_call.1} parent=1 // pred_check
      _
    $region7: #{tpu_custom_call.1} parent=1 // pred_check_branch
      %19 = sbr.rel (0) target = $region9
    $region8: #{tpu_custom_call.1} parent=1 // pred_region
      %20 = dma.done [#allocation3], 256
    $region9: #{tpu_custom_call.1} parent=1 // pred_fallthru
      _
    %v21 = vld [vmem:[#allocation2] sm:$0xff]
    %v22 = vld [vmem:[#allocation2 + $0x8] sm:$0xff]
    %23 = vst [vmem:[#allocation5] sm:$0xff] %v21
    %24 = vst [vmem:[#allocation5 + $0x8] sm:$0xff] %v22
    // Predicated region
    $region10: #{tpu_custom_call.1} parent=1 // pred_check
      _
    $region11: #{tpu_custom_call.1} parent=1 // pred_check_branch
      %26 = sbr.rel (0) target = $region13
    $region12: #{tpu_custom_call.1} parent=1 // pred_region
      %s28 = ssub.s32 256, 256
      %29 = vsyncadd [#allocation4], %s28
      %s31 = sshll.u32 [#allocation5], 4
      %s32 = int_to_ptr.vmem [resolvable:$true] %s31
      %34 = dma.vmem_to_hbm [thread:$0]  %s32, 256, %s1, [#allocation4]
    $region13: #{tpu_custom_call.1} parent=1 // pred_fallthru
      _
    // Predicated region
    $region14: #{tpu_custom_call.1} parent=1 // pred_check
      _
    $region15: #{tpu_custom_call.1} parent=1 // pred_check_branch
      %36 = sbr.rel (0) target = $region17
    $region16: #{tpu_custom_call.1} parent=1 // pred_region
      %37 = dma.done [#allocation4], 256
    $region17: #{tpu_custom_call.1} parent=1 // pred_fallthru
      _
    %38 = vsyncpa [#allocation3], 1
    %39 = vsyncpa [#allocation4], 1

</llo_original>
